<compile_context>
chip_gen: v6e
topology: v6e:2x2x1
jax: 0.10.0
libtpu: 0.0.40
codegen_flags: <defaults>
</compile_context>

<pallas_src>
import functools

import jax
import jax.numpy as jnp
from jax.experimental import pallas as pl
from jax.experimental.pallas import tpu as pltpu


def _round_up(x, m):
    return (x + m - 1) // m * m


def _focal_loss_kernel(x_ref, t_ref, a_ref, out_ref, *, gamma, hw, use_alpha):
    """One (1, C, T) logits slab -> one (1, 1, 1, 128) lane-dense partial sum."""
    j = pl.program_id(1)

    x = x_ref[0].astype(jnp.float32)            # (C, T): classes on sublanes
    t = t_ref[0].astype(jnp.int32)              # (1, T): target class per lane
    c_dim, t_dim = x.shape

    # Log-softmax statistics over the class (sublane) axis.  Cross-sublane
    # reduces go to the XLU, which has spare slots in this VPU/EUP-bound
    # kernel (review: native reduce instead of the per-sublane unroll).
    m = jnp.max(x, axis=0, keepdims=True)       # (1, T)
    z = x - m                                   # (C, T)
    e = jnp.exp(z)                              # (C, T)
    s = jnp.sum(e, axis=0, keepdims=True)       # (1, T)

    # Gather z at the target class with a one-hot compare over sublanes.  The
    # full (C, T) log-softmax is never materialized (saves a (C, T) subtract
    # and an f32 temporary at large tiles).
    cls = jax.lax.broadcasted_iota(jnp.int32, (c_dim, t_dim), 0)
    onehot = cls == t                           # (C, T)
    zt = jnp.sum(jnp.where(onehot, z, 0.0), axis=0, keepdims=True)   # (1, T)

    logpt = zt - jnp.log(s)                     # (1, T)
    pt = jnp.exp(logpt)                         # (1, T), cheap EUP op

    if use_alpha:
        a = a_ref[0].astype(jnp.float32)        # (C, 1)
        at = jnp.sum(jnp.where(onehot, a, 0.0), axis=0, keepdims=True)
        # NOTE: pt is taken BEFORE the alpha scaling of logpt; this matches
        # the quoted PyTorch FocalLoss ordering (differs from some other
        # focal-loss formulations).
        logpt = logpt * at

    # pt = exp(logpt) can round slightly above 1.0 in f32; clamp so that
    # (1 - pt) ** 0.5 stays finite.
    focal = jnp.maximum(1.0 - pt, 0.0)
    if gamma == 0.0:
        w = jnp.ones_like(focal)
    elif gamma == 0.5:
        w = jnp.sqrt(focal)
    elif gamma == 1.0:
        w = focal
    elif gamma == 2.0:
        w = focal * focal
    else:
        w = focal ** gamma
    loss = -1.0 * w * logpt                     # (1, T)

    # Only the ragged last tile needs masking (it reads unspecified OOB lanes
    # because the wrapper no longer pads to a tile multiple).  hw and t_dim
    # are static, so full-tile grids skip the iota/compare/select entirely.
    if hw % t_dim != 0:
        lane = jax.lax.broadcasted_iota(jnp.int32, (1, t_dim), 1)
        limit = jnp.where(j == pl.num_programs(1) - 1, hw - j * t_dim, t_dim)
        loss = jnp.where(lane < limit, loss, 0.0)

    # Fold the tile into a lane-dense (1, 128) partial-sum slab.  Use a few
    # independent accumulator chains so the fold is not one long serial VPU
    # dependence chain at large tiles.
    n_chunks = t_dim // 128
    k = min(8, n_chunks)
    accs = [loss[:, i * 128:(i + 1) * 128] for i in range(k)]
    for i in range(k, n_chunks):
        accs[i % k] = accs[i % k] + loss[:, i * 128:(i + 1) * 128]
    while len(accs) > 1:
        nxt = [accs[i] + accs[i + 1] for i in range(0, len(accs) - 1, 2)]
        if len(accs) % 2:
            nxt.append(accs[-1])
        accs = nxt
    out_ref[0, 0] = accs[0]                     # out block is (1, 1, 1, 128)


def focal_loss(x, target, gamma=0.5, alpha=None, size_average=True,
               tile_hw=None, vmem_budget_bytes=None):
    """Pallas FocalLoss forward.

    x: (N, C, H, W) logits (any float dtype) or (M, C).
    target: (N, H, W) / (M,) integer class indices.
    """
    if x.ndim > 2:
        n, c = x.shape[0], x.shape[1]
        x3 = x.reshape(n, c, -1)                # free collapse of H, W; no transpose
    else:
        # TODO(synk): a row-major 2-D variant (classes on lanes, lane-axis
        # softmax/gather) would avoid this full HBM transpose on the (M, C) path.
        c = x.shape[-1]
        n = 1
        x3 = jnp.transpose(x, (1, 0)).reshape(1, c, -1)
    hw = x3.shape[-1]
    total_rows = n * hw

    # Narrow target dtype: 4x (int8) / 2x (int16) less target HBM traffic.
    if c <= 127:
        t_dtype = jnp.int8
    elif c <= 32767:
        t_dtype = jnp.int16
    else:
        t_dtype = jnp.int32
    t3 = target.reshape(n, 1, hw).astype(t_dtype)

    # Alpha handling mirrors the PyTorch __init__ (float -> [a, 1-a]; list -> tensor).
    use_alpha = alpha is not None
    if alpha is None:
        alpha_arr = jnp.ones((1, c, 1), dtype=jnp.float32)
    elif isinstance(alpha, (float, int)):
        assert c == 2, "scalar alpha assumes binary classification ([a, 1-a])"
        alpha_arr = jnp.array([float(alpha), 1.0 - float(alpha)],
                              dtype=jnp.float32).reshape(1, c, 1)
    else:
        alpha_arr = jnp.asarray(alpha, dtype=jnp.float32).reshape(1, -1, 1)
        assert alpha_arr.shape[1] == c

    # ---- Per-generation tile / VMEM policy ---------------------------------
    try:
        vmem_cap = int(pltpu.get_tpu_info().vmem_capacity_bytes)
    except Exception:
        vmem_cap = 64 * 1024 * 1024             # conservative (v7x-sized) fallback
    if vmem_budget_bytes is None:
        # ~32 MiB on v5e/v6e (128 MiB VMEM), ~16 MiB on v7x (64 MiB per TC).
        vmem_budget_bytes = vmem_cap // 4

    bytes_x = jnp.dtype(x.dtype).itemsize
    sub = 8 if bytes_x >= 4 else (16 if bytes_x == 2 else 32)
    c_pad_in = _round_up(c, sub)                # sublane padding of the raw logits tile
    c_pad_f32 = _round_up(c, 8)                 # sublane padding of the f32 working set
    # Double-buffered logits + targets (targets conservatively 32 B/lane for
    # their own sublane padding) + ~4 live f32 (C, T) temporaries in-kernel.
    per_lane_bytes = 2 * (c_pad_in * bytes_x + 32) + 4 * c_pad_f32 * 4

    hw128 = _round_up(hw, 128)
    if tile_hw is None:
        tile = max(128, (vmem_budget_bytes // per_lane_bytes) // 128 * 128)
    else:
        tile = max(128, tile_hw // 128 * 128)
    tile = min(tile, hw128)

    # Keep >= 2 grid steps when n == 1 so both v7x TensorCores get work
    # (negligible cost on single-TC v5e/v6e).
    if n == 1 and tile >= hw and hw > 128:
        tile = _round_up(pl.cdiv(hw, 2), 128)

    num_tiles = pl.cdiv(hw, tile)
    grid = (n, num_tiles)

    est_step_bytes = per_lane_bytes * tile + (1 << 20)
    vmem_limit_bytes = int(min(vmem_cap * 3 // 4,
                               max(est_step_bytes + (8 << 20), 32 << 20)))

    partials = pl.pallas_call(
        functools.partial(_focal_loss_kernel, gamma=float(gamma), hw=hw,
                          use_alpha=use_alpha),
        out_shape=jax.ShapeDtypeStruct((n, num_tiles, 1, 128), jnp.float32),
        grid_spec=pltpu.PrefetchScalarGridSpec(
            num_scalar_prefetch=0,
            grid=grid,
            in_specs=[
                pl.BlockSpec((1, c, tile), lambda b, j: (b, 0, j)),   # logits, native layout
                pl.BlockSpec((1, 1, tile), lambda b, j: (b, 0, j)),   # targets, lane-dense
                pl.BlockSpec((1, c, 1), lambda b, j: (0, 0, 0)),      # alpha (broadcast, cached)
            ],
            out_specs=pl.BlockSpec((1, 1, 1, 128), lambda b, j: (b, j, 0, 0)),
        ),
        compiler_params=pltpu.CompilerParams(
            dimension_semantics=("parallel", "parallel"),
            vmem_limit_bytes=vmem_limit_bytes,
        ),
    )(x3, t3, alpha_arr)

    loss_sum = jnp.sum(partials)
    if size_average:
        return loss_sum / jnp.float32(total_rows)
    return loss_sum


def _focal_loss_ref(x, target, gamma=0.5, alpha=None, size_average=True):
    """Pure-JAX reference mirroring the PyTorch forward."""
    if x.ndim > 2:
        n, c = x.shape[0], x.shape[1]
        x2d = jnp.transpose(x.reshape(n, c, -1), (0, 2, 1)).reshape(-1, c)
    else:
        c = x.shape[-1]
        x2d = x.reshape(-1, c)
    t = target.reshape(-1)
    logp = jax.nn.log_softmax(x2d.astype(jnp.float32), axis=1)
    logpt = jnp.take_along_axis(logp, t[:, None], axis=1)[:, 0]
    pt = jnp.exp(logpt)
    if alpha is not None:
        if isinstance(alpha, (float, int)):
            a = jnp.array([float(alpha), 1.0 - float(alpha)], dtype=jnp.float32)
        else:
            a = jnp.asarray(alpha, dtype=jnp.float32)
        logpt = logpt * a[t]
    loss = -1.0 * (1.0 - pt) ** gamma * logpt
    return loss.mean() if size_average else loss.sum()


if __name__ == "__main__":
    key = jax.random.PRNGKey(0)
    kx, kt, kx2, kt2, kx3, kt3, kx4, kt4 = jax.random.split(key, 8)

    # Default module config: gamma=0.5, alpha=None, size_average=True.
    N, C, H, W = 2, 4, 16, 16
    x = jax.random.normal(kx, (N, C, H, W), dtype=jnp.float32)
    target = jax.random.randint(kt, (N, H, W), 0, C, dtype=jnp.int32)
    out = jax.block_until_ready(focal_loss(x, target, gamma=0.5, alpha=None,
                                           size_average=True))
    ref = _focal_loss_ref(x, target, gamma=0.5, alpha=None, size_average=True)
    assert jnp.allclose(out, ref, rtol=1e-5, atol=1e-5), (out, ref)

    # List-alpha path, gamma=2.0.
    alpha_list = [0.1, 0.2, 0.3, 0.4]
    out_a = jax.block_until_ready(focal_loss(x, target, gamma=2.0, alpha=alpha_list))
    ref_a = _focal_loss_ref(x, target, gamma=2.0, alpha=alpha_list)
    assert jnp.allclose(out_a, ref_a, rtol=1e-5, atol=1e-5), (out_a, ref_a)

    # Non-128-multiple spatial size: single ragged tile, OOB lanes masked.
    H2, W2 = 10, 10
    x2 = jax.random.normal(kx2, (N, C, H2, W2), dtype=jnp.float32)
    target2 = jax.random.randint(kt2, (N, H2, W2), 0, C, dtype=jnp.int32)
    out_p = jax.block_until_ready(focal_loss(x2, target2, gamma=0.5))
    ref_p = _focal_loss_ref(x2, target2, gamma=0.5)
    assert jnp.allclose(out_p, ref_p, rtol=1e-5, atol=1e-5), (out_p, ref_p)

    # Multi-tile, no-pad path with a ragged LAST tile (hw=400, tile=128):
    # verifies on hardware that OOB reads in the final block are masked out.
    H3, W3 = 20, 20
    x3_ = jax.random.normal(kx3, (N, C, H3, W3), dtype=jnp.float32)
    target3 = jax.random.randint(kt3, (N, H3, W3), 0, C, dtype=jnp.int32)
    out_m = jax.block_until_ready(focal_loss(x3_, target3, gamma=0.5, tile_hw=128))
    ref_m = _focal_loss_ref(x3_, target3, gamma=0.5)
    assert jnp.allclose(out_m, ref_m, rtol=1e-5, atol=1e-5), (out_m, ref_m)

    # N == 1: the wrapper splits the image into >= 2 tiles (v7x 2-TC rule).
    x4 = jax.random.normal(kx4, (1, C, H, W), dtype=jnp.float32)
    target4 = jax.random.randint(kt4, (1, H, W), 0, C, dtype=jnp.int32)
    out_s = jax.block_until_ready(focal_loss(x4, target4, gamma=0.5))
    ref_s = _focal_loss_ref(x4, target4, gamma=0.5)
    assert jnp.allclose(out_s, ref_s, rtol=1e-5, atol=1e-5), (out_s, ref_s)

    print("KERNEL_OK")
</pallas_src>

<mosaic_0001>
module attributes {stable_mosaic.version = 11 : i64} {
  func.func @_focal_loss_kernel(%arg0: i32, %arg1: i32, %arg2: memref<1x4x256xf32, #tpu.memory_space<vmem>>, %arg3: memref<1x1x256xi8, #tpu.memory_space<vmem>>, %arg4: memref<1x4x1xf32, #tpu.memory_space<vmem>>, %arg5: memref<1x1x1x128xf32, #tpu.memory_space<vmem>>) attributes {dimension_semantics = [#tpu.dimension_semantics<parallel>, #tpu.dimension_semantics<parallel>], iteration_bounds = array<i64: 2, 1>, scalar_prefetch = 0 : i64, scratch_operands = 0 : i64, tpu.core_type = #tpu.core_type<tc>, window_params = [{transform_indices = @transform_0, window_bounds = array<i64: 1, 4, 256>}, {transform_indices = @transform_1, window_bounds = array<i64: 1, 1, 256>}, {pipeline_mode = #tpu.pipeline_mode<synchronous>, transform_indices = @transform_2, window_bounds = array<i64: 1, 4, 1>}, {transform_indices = @transform_3, window_bounds = array<i64: 1, 1, 1, 128>}]} {
    %c0 = arith.constant 0 : index
    %c0_0 = arith.constant 0 : index
    %c0_1 = arith.constant 0 : index
    %0 = vector.load %arg2[%c0, %c0_0, %c0_1] : memref<1x4x256xf32, #tpu.memory_space<vmem>>, vector<1x4x256xf32>
    %1 = vector.shape_cast %0 : vector<1x4x256xf32> to vector<4x256xf32>
    %c0_2 = arith.constant 0 : index
    %c0_3 = arith.constant 0 : index
    %c0_4 = arith.constant 0 : index
    %2 = vector.load %arg3[%c0_2, %c0_3, %c0_4] : memref<1x1x256xi8, #tpu.memory_space<vmem>>, vector<1x1x256xi8>
    %3 = vector.shape_cast %2 : vector<1x1x256xi8> to vector<1x256xi8>
    %4 = arith.extsi %3 : vector<1x256xi8> to vector<1x256xi32>
    %cst = arith.constant dense<0xFF800000> : vector<256xf32>
    %5 = vector.multi_reduction <maximumf>, %1, %cst [0] : vector<4x256xf32> to vector<256xf32>
    %6 = vector.shape_cast %5 : vector<256xf32> to vector<1x256xf32>
    %7 = vector.broadcast %6 : vector<1x256xf32> to vector<4x256xf32>
    %8 = arith.subf %1, %7 : vector<4x256xf32>
    %9 = math.exp %8 : vector<4x256xf32>
    %cst_5 = arith.constant dense<0.000000e+00> : vector<256xf32>
    %10 = vector.multi_reduction <add>, %9, %cst_5 [0] : vector<4x256xf32> to vector<256xf32>
    %11 = vector.shape_cast %10 : vector<256xf32> to vector<1x256xf32>
    %12 = tpu.iota {dimensions = array<i32: 0>} : vector<4x256xi32>
    %13 = vector.broadcast %4 : vector<1x256xi32> to vector<4x256xi32>
    %14 = arith.cmpi eq, %12, %13 : vector<4x256xi32>
    %cst_6 = arith.constant 0.000000e+00 : f32
    %15 = vector.broadcast %cst_6 : f32 to vector<4x256xf32>
    %16 = arith.select %14, %8, %15 : vector<4x256xi1>, vector<4x256xf32>
    %cst_7 = arith.constant dense<0.000000e+00> : vector<256xf32>
    %17 = vector.multi_reduction <add>, %16, %cst_7 [0] : vector<4x256xf32> to vector<256xf32>
    %18 = vector.shape_cast %17 : vector<256xf32> to vector<1x256xf32>
    %19 = math.log %11 : vector<1x256xf32>
    %20 = arith.subf %18, %19 : vector<1x256xf32>
    %21 = math.exp %20 : vector<1x256xf32>
    %cst_8 = arith.constant 1.000000e+00 : f32
    %22 = vector.broadcast %cst_8 : f32 to vector<1x256xf32>
    %23 = arith.subf %22, %21 : vector<1x256xf32>
    %cst_9 = arith.constant 0.000000e+00 : f32
    %24 = vector.broadcast %cst_9 : f32 to vector<1x256xf32>
    %25 = arith.maximumf %23, %24 : vector<1x256xf32>
    %26 = math.sqrt %25 : vector<1x256xf32>
    %cst_10 = arith.constant -1.000000e+00 : f32
    %27 = vector.broadcast %cst_10 : f32 to vector<1x256xf32>
    %28 = arith.mulf %27, %26 : vector<1x256xf32>
    %29 = arith.mulf %28, %20 : vector<1x256xf32>
    %30 = vector.extract_strided_slice %29 {offsets = [0, 0], sizes = [1, 128], strides = [1, 1]} : vector<1x256xf32> to vector<1x128xf32>
    %31 = vector.extract_strided_slice %29 {offsets = [0, 128], sizes = [1, 128], strides = [1, 1]} : vector<1x256xf32> to vector<1x128xf32>
    %32 = arith.addf %30, %31 : vector<1x128xf32>
    %c0_11 = arith.constant 0 : index
    %c0_12 = arith.constant 0 : index
    %c0_13 = arith.constant 0 : index
    %c0_14 = arith.constant 0 : index
    %33 = vector.load %arg5[%c0_11, %c0_12, %c0_13, %c0_14] : memref<1x1x1x128xf32, #tpu.memory_space<vmem>>, vector<1x1x1x128xf32>
    %34 = vector.shape_cast %33 : vector<1x1x1x128xf32> to vector<1x128xf32>
    %35 = vector.shape_cast %32 : vector<1x128xf32> to vector<1x1x1x128xf32>
    tpu.vector_store %arg5[%c0_11, %c0_12, %c0_13, %c0_14], %35 {strides = array<i32>} : memref<1x1x1x128xf32, #tpu.memory_space<vmem>>, vector<1x1x1x128xf32>,
    return
  }
  func.func @transform_0(%arg0: i32, %arg1: i32) -> (i32, i32, i32) {
    %c0_i32 = arith.constant 0 : i32
    %c0_i32_0 = arith.constant 0 : i32
    return %arg0, %c0_i32, %arg1 : i32, i32, i32
  }
  func.func @transform_1(%arg0: i32, %arg1: i32) -> (i32, i32, i32) {
    %c0_i32 = arith.constant 0 : i32
    %c0_i32_0 = arith.constant 0 : i32
    return %arg0, %c0_i32, %arg1 : i32, i32, i32
  }
  func.func @transform_2(%arg0: i32, %arg1: i32) -> (i32, i32, i32) {
    %c0_i32 = arith.constant 0 : i32
    %c0_i32_0 = arith.constant 0 : i32
    %c0_i32_1 = arith.constant 0 : i32
    %c0_i32_2 = arith.constant 0 : i32
    return %c0_i32, %c0_i32_0, %c0_i32_1 : i32, i32, i32
  }
  func.func @transform_3(%arg0: i32, %arg1: i32) -> (i32, i32, i32, i32) {
    %c0_i32 = arith.constant 0 : i32
    %c0_i32_0 = arith.constant 0 : i32
    %c0_i32_1 = arith.constant 0 : i32
    return %arg0, %arg1, %c0_i32, %c0_i32_0 : i32, i32, i32, i32
  }
}

</mosaic_0001>

<llo_original>
// kernel: tpu_custom_call.1
$region0: #{tpu_custom_call.1}
  #allocation0 [shape = 'u32[]', space=smem, size = 0x4, offset = 0x4, fixed_abs, tag = 'smem constant byte address 0x4 - core index']
  #allocation1 [shape = 'u32[144,128]{1,0:T(1,128)}', space=vmem, size = 0x12000, scoped, tag = 'internal scratch']
  %s0 = inlined_call_operand.hbm [shape: f32[2,4,256], index: 0, kind: input, shape index: {}]
  %s1 = inlined_call_operand.vmem [shape: s8[2,1,256], index: 1, kind: input, shape index: {}]
  %s2 = inlined_call_operand.vmem [shape: f32[1,4,1], index: 2, kind: input, shape index: {}]
  %s3 = inlined_call_operand.hbm [shape: f32[2,1,1,128], index: 3, kind: output, shape index: {}]
  %s4 = sld [smem:[#allocation0]]
  $region49: #{tpu_custom_call.1} parent=0
    _
  %s6 = ssub.s32 1, %s4
  %s7 = scalar_select 0, %s6, %s4
  $region1: #{tpu_custom_call.1} parent=0
    #allocation2 [shape = 'u8[8192]{0}', space=vmem, size = 0x2000, scoped, tag = 'input window, operand 0']
    #allocation3 [shape = 's32[2]{0}', space=sflag, size = 0x8, scoped, tag = 'scoped memory for tpu_custom_call.1']
    #allocation4 [shape = 's32[2]{0}', space=sflag, size = 0x8, scoped, tag = 'scoped memory for tpu_custom_call.1']
    #allocation5 [shape = 'u8[1024]{0}', space=vmem, size = 0x400, scoped, tag = 'output window, operand 0']
    %8 = vsyncpa [#allocation3], 0
    %s9 = scalar_lea.sflag [#allocation3], 1
    %10 = vsyncpa %s9, 0
    %11 = vsyncpa [#allocation4], 0
    %s12 = scalar_lea.sflag [#allocation4], 1
    %13 = vsyncpa %s12, 0
    loop: start=0, step=1, limit=4
    $region2: #{tpu_custom_call.1} parent=1 // loop_pre_header
      _
    $region3: #{tpu_custom_call.1} parent=1 // loop_header
      %s15 = sphi 0, %s19
      %p16 = scmp.ge.s32.totalorder %s15, 4
      %s22 = sphi 0, %s34
      %s23 = sphi 0, %s30
      %s24 = sphi 0, %s22
      %s25 = sphi 0, %s23
      %s26 = sphi 0, %s24
      %s27 = sphi 0, %s25
      %s39 = sphi 0, %s41
      %s42 = sphi 0, %s39
      %s43 = sphi 0, %s42
      %s59 = sphi 0, %s43
      %s67 = sphi 0, %s69
      %s70 = sphi 0, %s67
      %s71 = sphi 0, %s70
      %s87 = sphi 0, %s71
      %s91 = sphi 0, %s91
      %s93 = sphi 0, %s91
      %s94 = sphi 0, %s93
      %s108 = sphi 0, %s94
      %s116 = sphi 0, %s118
      %s119 = sphi 0, %s116
      %s120 = sphi 0, %s119
      %s136 = sphi 0, %s120
    $region4: #{tpu_custom_call.1} parent=1 // loop_header_branch
      %18 = sbr.rel (%p16) target = $region8
    $region5: #{tpu_custom_call.1} parent=1 // loop_body
      %s20 = ssub.s32 %s15, 1
      %s21 = ssub.s32 %s15, 2
      %s28 = sadd.s32 1, %s23
      %p29 = scmp.ge.s32.totalorder %s28, 1
      %s30 = scalar_select %p29, 0, %s28
      %s31 = sadd.s32 1, %s22
      %s32 = scalar_select %p29, %s31, %s22
      %p33 = scmp.ge.s32.totalorder %s32, 2
      %s34 = scalar_select %p33, 0, %s32
      %s35 = ssub.s32 %s22, %s34
      %s36 = ssub.s32 %s23, %s30
      %s37 = sor.u32 %s35, %s36
      %p38 = scmp.eq.s32.totalorder %s37, 0
      %s40 = sadd.s32 %s39, 1
      %s41 = scalar_select %p38, %s39, %s40
      %p44 = pneg %p38
      %p45 = scmp.eq.s32.totalorder %s15, 1
      %p46 = por %p44, %p45
      %p47 = scmp.ne.s32.totalorder %s39, %s42
      %p48 = scmp.eq.s32.totalorder %s15, 0
      %p49 = por %p47, %p48
      %p50 = scmp.ne.s32.totalorder %s39, %s42
      %p51 = scmp.eq.s32.totalorder %s20, 1
      %p52 = por %p50, %p51
      %p53 = scmp.ne.s32.totalorder %s42, %s43
      %p54 = scmp.eq.s32.totalorder %s20, 0
      %p55 = por %p53, %p54
      %p56 = scmp.ne.s32.totalorder %s42, %s43
      %p57 = scmp.eq.s32.totalorder %s21, 1
      %p58 = por %p56, %p57
      %p60 = scmp.ne.s32.totalorder %s43, %s59
      %p61 = scmp.eq.s32.totalorder %s21, 0
      %p62 = por %p60, %p61
      %s63 = ssub.s32 %s22, %s34
      %s64 = ssub.s32 %s23, %s30
      %s65 = sor.u32 %s63, %s64
      %p66 = scmp.eq.s32.totalorder %s65, 0
      %s68 = sadd.s32 %s67, 1
      %s69 = scalar_select %p66, %s67, %s68
      %p72 = pneg %p66
      %p73 = scmp.eq.s32.totalorder %s15, 1
      %p74 = por %p72, %p73
      %p75 = scmp.ne.s32.totalorder %s67, %s70
      %p76 = scmp.eq.s32.totalorder %s15, 0
      %p77 = por %p75, %p76
      %p78 = scmp.ne.s32.totalorder %s67, %s70
      %p79 = scmp.eq.s32.totalorder %s20, 1
      %p80 = por %p78, %p79
      %p81 = scmp.ne.s32.totalorder %s70, %s71
      %p82 = scmp.eq.s32.totalorder %s20, 0
      %p83 = por %p81, %p82
      %p84 = scmp.ne.s32.totalorder %s70, %s71
      %p85 = scmp.eq.s32.totalorder %s21, 1
      %p86 = por %p84, %p85
      %p88 = scmp.ne.s32.totalorder %s71, %s87
      %p89 = scmp.eq.s32.totalorder %s21, 0
      %p90 = por %p88, %p89
      %s92 = sadd.s32 %s91, 1
      %p95 = scmp.eq.s32.totalorder %s15, 1
      %p96 = scmp.ne.s32.totalorder %s91, %s93
      %p97 = scmp.eq.s32.totalorder %s15, 0
      %p98 = por %p96, %p97
      %p99 = scmp.ne.s32.totalorder %s91, %s93
      %p100 = scmp.eq.s32.totalorder %s20, 1
      %p101 = por %p99, %p100
      %p102 = scmp.ne.s32.totalorder %s93, %s94
      %p103 = scmp.eq.s32.totalorder %s20, 0
      %p104 = por %p102, %p103
      %p105 = scmp.ne.s32.totalorder %s93, %s94
      %p106 = scmp.eq.s32.totalorder %s21, 1
      %p107 = por %p105, %p106
      %p109 = scmp.ne.s32.totalorder %s94, %s108
      %p110 = scmp.eq.s32.totalorder %s21, 0
      %p111 = por %p109, %p110
      %s112 = ssub.s32 %s22, %s34
      %s113 = ssub.s32 %s23, %s30
      %s114 = sor.u32 %s112, %s113
      %p115 = scmp.eq.s32.totalorder %s114, 0
      %s117 = sadd.s32 %s116, 1
      %s118 = scalar_select %p115, %s116, %s117
      %p121 = pneg %p115
      %p122 = scmp.eq.s32.totalorder %s15, 1
      %p123 = por %p121, %p122
      %p124 = scmp.ne.s32.totalorder %s116, %s119
      %p125 = scmp.eq.s32.totalorder %s15, 0
      %p126 = por %p124, %p125
      %p127 = scmp.ne.s32.totalorder %s116, %s119
      %p128 = scmp.eq.s32.totalorder %s20, 1
      %p129 = por %p127, %p128
      %p130 = scmp.ne.s32.totalorder %s119, %s120
      %p131 = scmp.eq.s32.totalorder %s20, 0
      %p132 = por %p130, %p131
      %p133 = scmp.ne.s32.totalorder %s119, %s120
      %p134 = scmp.eq.s32.totalorder %s21, 1
      %p135 = por %p133, %p134
      %p137 = scmp.ne.s32.totalorder %s120, %s136
      %p138 = scmp.eq.s32.totalorder %s21, 0
      %p139 = por %p137, %p138
      %p140 = scmp.le.s32.totalorder 1, %s15
      %p141 = scmp.lt.s32.totalorder %s15, 3
      %p142 = pnand %p140, %p141
      %p143 = pneg %p142
      // Predicated region
      $region9: #{tpu_custom_call.1} parent=5 // pred_check
        _
      $region10: #{tpu_custom_call.1} parent=5 // pred_check_branch
        %145 = sbr.rel (%p142) target = $region12
      $region11: #{tpu_custom_call.1} parent=5 // pred_region
        %s146 = ssub.s32 %s15, 1
        // Predicated region
        $region13: #{tpu_custom_call.1} parent=11 // pred_check
          %p147 = pneg %p104
        $region14: #{tpu_custom_call.1} parent=11 // pred_check_branch
          %149 = sbr.rel (%p147) target = $region16
        $region15: #{tpu_custom_call.1} parent=11 // pred_region
          _
        $region16: #{tpu_custom_call.1} parent=11 // pred_fallthru
          _
      $region12: #{tpu_custom_call.1} parent=5 // pred_fallthru
        _
      %p150 = scmp.lt.s32.totalorder %s15, 2
      // Predicated region
      $region17: #{tpu_custom_call.1} parent=5 // pred_check
        %p151 = pneg %p150
      $region18: #{tpu_custom_call.1} parent=5 // pred_check_branch
        %153 = sbr.rel (%p151) target = $region20
      $region19: #{tpu_custom_call.1} parent=5 // pred_region
        // Predicated region
        $region21: #{tpu_custom_call.1} parent=19 // pred_check
          %p154 = pneg %p49
        $region22: #{tpu_custom_call.1} parent=19 // pred_check_branch
          %156 = sbr.rel (%p154) target = $region24
        $region23: #{tpu_custom_call.1} parent=19 // pred_region
          %s157 = sand.u32 %s39, 1
          %s158 = scalar_lea.sflag [#allocation3], %s157
          %s159 = sand.u32 %s39, 1
          %s160 = smul.addr %s159, 8
          %s161 = scalar_lea.vmem [#allocation2], %s160
          %s162 = smul.u32 2, %s23
          %s164 = ssub.s32 128, 128
          %165 = vsyncadd %s158, %s164
          %s166 = smul.addr %s22, 2
          %s167 = sadd.s32 %s162, %s166
          %s168 = smul.addr %s167, 64
          %s169 = scalar_lea.hbm %s0, %s168
          %s171 = sshll.u32 %s161, 4
          %s172 = int_to_ptr.vmem [resolvable:$true] %s171
          %174 = dma.hbm_to_vmem [thread:$0]  %s169, 128, %s172, %s158
        $region24: #{tpu_custom_call.1} parent=19 // pred_fallthru
          _
        // Predicated region
        $region25: #{tpu_custom_call.1} parent=19 // pred_check
          %p175 = pneg %p77
        $region26: #{tpu_custom_call.1} parent=19 // pred_check_branch
          %177 = sbr.rel (%p175) target = $region28
        $region27: #{tpu_custom_call.1} parent=19 // pred_region
          %s178 = smul.u32 2, %s23
          %p179 = scmp.lt.s32.totalorder %s22, 1
          %s180 = scalar_select %p179, %s22, 1
          %p181 = scmp.lt.s32.totalorder %s178, 1
          %s182 = scalar_select %p181, %s178, 1
          %s183 = smul.addr %s180, 2
          %s184 = sadd.s32 %s182, %s183
          %s185 = scalar_lea.vmem %s1, %s184
          %s186 = smul.u32 2, %s23
        $region28: #{tpu_custom_call.1} parent=19 // pred_fallthru
          _
      $region20: #{tpu_custom_call.1} parent=5 // pred_fallthru
        _
      %p187 = scmp.le.s32.totalorder 1, %s15
      %p188 = scmp.lt.s32.totalorder %s15, 3
      %p189 = pnand %p187, %p188
      %p190 = pneg %p189
      // Predicated region
      $region29: #{tpu_custom_call.1} parent=5 // pred_check
        _
      $region30: #{tpu_custom_call.1} parent=5 // pred_check_branch
        %192 = sbr.rel (%p189) target = $region32
      $region31: #{tpu_custom_call.1} parent=5 // pred_region
        %s193 = ssub.s32 %s15, 1
        %s194 = sand.u32 %s42, 1
        %s195 = scalar_lea.sflag [#allocation3], %s194
        %s196 = sand.u32 %s42, 1
        %s197 = smul.addr %s196, 8
        %s198 = scalar_lea.vmem [#allocation2], %s197
        // Predicated region
        $region33: #{tpu_custom_call.1} parent=31 // pred_check
          %p199 = pneg %p55
        $region34: #{tpu_custom_call.1} parent=31 // pred_check_branch
          %201 = sbr.rel (%p199) target = $region36
        $region35: #{tpu_custom_call.1} parent=31 // pred_region
          %202 = dma.done %s195, 128
        $region36: #{tpu_custom_call.1} parent=31 // pred_fallthru
          _
        %s203 = sand.u32 %s42, 1
        %s204 = scalar_lea.sflag [#allocation3], %s203
        %s205 = sand.u32 %s42, 1
        %s206 = smul.addr %s205, 8
        %s207 = scalar_lea.vmem [#allocation2], %s206
        %p208 = pneg %p55
        %p209 = pneg %p52
        %s210 = smul.u32 2, %s25
        %p211 = scmp.lt.s32.totalorder %s24, 1
        %s212 = scalar_select %p211, %s24, 1
        %p213 = scmp.lt.s32.totalorder %s210, 1
        %s214 = scalar_select %p213, %s210, 1
        %s215 = smul.addr %s212, 2
        %s216 = sadd.s32 %s214, %s215
        %s217 = scalar_lea.vmem %s1, %s216
        %p218 = pneg %p83
        %p219 = pneg %p80
        %p220 = pneg %p104
        %p221 = pneg %p101
        %p222 = pneg %p132
        %p223 = pneg %p129
        %s224 = sand.u32 %s119, 1
        %s225 = scalar_lea.sflag [#allocation4], %s224
        %s226 = sand.u32 %s119, 1
        %s227 = scalar_lea.vmem [#allocation5], %s226
        %s228 = smul.u32 2, %s25
        %s229 = smul.u32 2, %s25
        %p230 = scmp.lt.s32.totalorder %s24, 1
        %s231 = scalar_select %p230, %s24, 1
        %p232 = scmp.lt.s32.totalorder %s229, 1
        %s233 = scalar_select %p232, %s229, 1
        %s234 = smul.addr %s231, 2
        %s235 = sadd.s32 %s233, %s234
        %s236 = scalar_lea.vmem %s1, %s235
        %s237 = smul.u32 2, %s25
        %v238 = vld [vmem:[%s198] sm:$0xff]
        %v239 = vld [vmem:[%s236] sm:$0x3]
        %v240 = vunpack.c.0.s8 %v239
        %v242 = vcombine.high %v238, %v238
        %vm244 = vcmask 1043456
        %v245 = vsel %vm244, %v238, -inf
        %v246 = vrot.slane %v245, 4
        %v247 = vmax.f32 %v245, %v246
        %v248 = vrot.slane %v247, 2
        %v249 = vmax.f32 %v247, %v248
        %v250 = vrot.slane %v249, 1
        %v251 = vmax.f32 %v249, %v250
        %v252 = vsel %vm244, %v242, -inf
        %v253 = vrot.slane %v252, 4
        %v254 = vmax.f32 %v252, %v253
        %v255 = vrot.slane %v254, 2
        %v256 = vmax.f32 %v254, %v255
        %v257 = vrot.slane %v256, 1
        %v258 = vmax.f32 %v256, %v257
        %v261 = vcombine.low %v251, %v258
        %v263 = vsub.f32 %v238, %v261
        %v264 = vmul.f32 %v263, 1.442695
        %v265 = vpow.pop %v264
        %v267 = vcombine.high %v265, %v265
        %v269 = vsel %vm244, %v265, 0.0
        %v270 = vrot.slane %v269, 4
        %v271 = vadd.f32 %v269, %v270
        %v272 = vrot.slane %v271, 2
        %v273 = vadd.f32 %v271, %v272
        %v274 = vrot.slane %v273, 1
        %v275 = vadd.f32 %v273, %v274
        %v276 = vsel %vm244, %v267, 0.0
        %v277 = vrot.slane %v276, 4
        %v278 = vadd.f32 %v276, %v277
        %v279 = vrot.slane %v278, 2
        %v280 = vadd.f32 %v278, %v279
        %v281 = vrot.slane %v280, 1
        %v282 = vadd.f32 %v280, %v281
        %v283 = vlaneseq
        %v284 = vshrl.u32 %v283, 7
        %v285 = vlaneseq
        %v286 = vshrl.u32 %v285, 7
        %v287 = vsub.s32 0, %v286
        %v288 = vrot.slane %v240, %v287
        %v289 = vlaneseq
        %v290 = vshrl.u32 %v289, 7
        %v291 = vsub.s32 4, %v290
        %v292 = vrot.slane %v240, %v291
        %v293 = vlaneseq
        %v294 = vshrl.u32 %v293, 7
        %v295 = vsub.s32 0, %v294
        %v296 = vrot.slane %v288, %v295
        %v297 = vlaneseq
        %v298 = vshrl.u32 %v297, 7
        %v299 = vsub.s32 0, %v298
        %v300 = vrot.slane %v292, %v299
        %vm301 = vcmp.eq.s32.totalorder %v284, %v296
        %vm302 = vcmp.eq.s32.totalorder %v284, %v300
        %v304 = vcombine.high %v263, %v263
        %v306 = vsel %vm301, %v263, 0.0
        %v307 = vsel %vm302, %v304, 0.0
        %v308 = vsel %vm244, %v306, 0.0
        %v309 = vrot.slane %v308, 4
        %v310 = vadd.f32 %v308, %v309
        %v311 = vrot.slane %v310, 2
        %v312 = vadd.f32 %v310, %v311
        %v313 = vrot.slane %v312, 1
        %v314 = vadd.f32 %v312, %v313
        %v315 = vsel %vm244, %v307, 0.0
        %v316 = vrot.slane %v315, 4
        %v317 = vadd.f32 %v315, %v316
        %v318 = vrot.slane %v317, 2
        %v319 = vadd.f32 %v317, %v318
        %v320 = vrot.slane %v319, 1
        %v321 = vadd.f32 %v319, %v320
        %v322 = vlog2.pop %v275
        %v323 = vmul.f32 %v322, 0.6931472
        %v324 = vlog2.pop %v282
        %v325 = vmul.f32 %v324, 0.6931472
        %v326 = vsub.f32 %v314, %v323
        %v327 = vsub.f32 %v321, %v325
        %v328 = vmul.f32 %v326, 1.442695
        %v329 = vpow.pop %v328
        %v330 = vmul.f32 %v327, 1.442695
        %v331 = vpow.pop %v330
        %v332 = vsub.f32 1.0, %v329
        %v333 = vsub.f32 1.0, %v331
        %v334 = vmax.f32 %v332, 0.0
        %v335 = vmax.f32 %v333, 0.0
        %v336 = vrsqrt.pop %v334
        %v337 = vmul.f32 %v334, %v336
        %vm338 = vcmp.eq.f32.partialorder %v334, inf
        %v339 = vsel %vm338, %v334, %v337
        %vm340 = vcmp.eq.f32.partialorder %v334, 0.0
        %v341 = vand.u32 %v334, 2147483648
        %v342 = vsel %vm340, %v341, %v339
        %v343 = vrsqrt.pop %v335
        %v344 = vmul.f32 %v335, %v343
        %vm345 = vcmp.eq.f32.partialorder %v335, inf
        %v346 = vsel %vm345, %v335, %v344
        %vm347 = vcmp.eq.f32.partialorder %v335, 0.0
        %v348 = vand.u32 %v335, 2147483648
        %v349 = vsel %vm347, %v348, %v346
        %v350 = vmul.f32 %v342, -1.0
        %v351 = vmul.f32 %v349, -1.0
        %v352 = vmul.f32 %v350, %v326
        %v353 = vmul.f32 %v351, %v327
        %v354 = vadd.f32 %v352, %v353
        %355 = vst [vmem:[%s227] sm:$0x1] %v354
        %s356 = sand.u32 %s119, 1
        %s357 = scalar_lea.sflag [#allocation4], %s356
        %s358 = sand.u32 %s119, 1
        %s359 = scalar_lea.vmem [#allocation5], %s358
        // Predicated region
        $region37: #{tpu_custom_call.1} parent=31 // pred_check
          %p360 = pneg %p129
        $region38: #{tpu_custom_call.1} parent=31 // pred_check_branch
          %362 = sbr.rel (%p360) target = $region40
        $region39: #{tpu_custom_call.1} parent=31 // pred_region
          %s364 = ssub.s32 16, 16
          %365 = vsyncadd %s357, %s364
          %s366 = sadd.s32 %s25, %s24
          %s367 = smul.addr %s366, 16
          %s368 = scalar_lea.hbm %s3, %s367
          %s370 = sshll.u32 %s359, 4
          %s371 = int_to_ptr.vmem [resolvable:$true] %s370
          %373 = dma.vmem_to_hbm [thread:$0]  %s371, 16, %s368, %s357
        $region40: #{tpu_custom_call.1} parent=31 // pred_fallthru
          _
      $region32: #{tpu_custom_call.1} parent=5 // pred_fallthru
        _
      %p374 = scmp.le.s32.totalorder 2, %s15
      // Predicated region
      $region41: #{tpu_custom_call.1} parent=5 // pred_check
        %p375 = pneg %p374
      $region42: #{tpu_custom_call.1} parent=5 // pred_check_branch
        %377 = sbr.rel (%p375) target = $region44
      $region43: #{tpu_custom_call.1} parent=5 // pred_region
        %s378 = ssub.s32 %s15, 2
        // Predicated region
        $region45: #{tpu_custom_call.1} parent=43 // pred_check
          %p379 = pneg %p135
        $region46: #{tpu_custom_call.1} parent=43 // pred_check_branch
          %381 = sbr.rel (%p379) target = $region48
        $region47: #{tpu_custom_call.1} parent=43 // pred_region
          %s382 = sand.u32 %s120, 1
          %s383 = scalar_lea.sflag [#allocation4], %s382
          %s384 = sand.u32 %s120, 1
          %s385 = scalar_lea.vmem [#allocation5], %s384
          %386 = dma.done %s383, 16
        $region48: #{tpu_custom_call.1} parent=43 // pred_fallthru
          _
      $region44: #{tpu_custom_call.1} parent=5 // pred_fallthru
        _
    $region6: #{tpu_custom_call.1} parent=1 // loop_footer
      %s19 = sadd.s32 1, %s15
    $region7: #{tpu_custom_call.1} parent=1 // loop_footer_branch
      %14 = sbr.rel target = $region3
    $region8: #{tpu_custom_call.1} parent=1 // loop_exit
      _
    %387 = vsyncpa [#allocation3], 1
    %s388 = scalar_lea.sflag [#allocation3], 1
    %389 = vsyncpa %s388, 1
    %390 = vsyncpa [#allocation4], 1
    %s391 = scalar_lea.sflag [#allocation4], 1
    %392 = vsyncpa %s391, 1

</llo_original>
